<compile_context>
chip_gen: v7x
topology: tpu7x:2x2x1
jax: 0.10.0
libtpu: 0.0.40
codegen_flags: <defaults>
</compile_context>

<pallas_src>
import functools

import jax
import jax.numpy as jnp
from jax.experimental import pallas as pl
from jax.experimental.pallas import tpu as pltpu


def _hash_u32(x):
    """Murmur3-style 32-bit integer finalizer (portable counter-based PRNG)."""
    x = x ^ (x >> jnp.uint32(16))
    x = x * jnp.uint32(0x7FEB352D)
    x = x ^ (x >> jnp.uint32(15))
    x = x * jnp.uint32(0x846CA68B)
    x = x ^ (x >> jnp.uint32(16))
    return x


def _embed_dropout_kernel(ids_ref, seed_ref, emb_ref, out_ref, *,
                          tm, dropout_rate, apply_dropout):
    # ids_ref / seed_ref: SMEM scalar-prefetch refs.
    # emb_ref: full (V, D) embedding table, VMEM-resident (constant index_map).
    # out_ref: (TM, D) sublane-dense output tile.
    i = pl.program_id(0)
    base = i * tm

    # Gather TM embedding rows from the VMEM-resident table.
    for r in range(tm):
        tok = ids_ref[base + r]
        out_ref[r, :] = emb_ref[tok, :].astype(out_ref.dtype)

    if apply_dropout and dropout_rate > 0.0:
        tm_, d = out_ref.shape
        # One bulk draw for the whole tile: bits = hash(seed, global elem id).
        row_idx = jax.lax.broadcasted_iota(jnp.uint32, (tm_, d), 0)
        col_idx = jax.lax.broadcasted_iota(jnp.uint32, (tm_, d), 1)
        gid = (base.astype(jnp.uint32) + row_idx) * jnp.uint32(d) + col_idx
        mixed_seed = _hash_u32(seed_ref[0].astype(jnp.uint32))
        bits = _hash_u32(gid ^ mixed_seed)

        # Integer threshold compare: drop with probability ~= dropout_rate.
        thresh = jnp.uint32(min(int(dropout_rate * (2 ** 32)), 2 ** 32 - 1))
        keep = bits >= thresh
        scale = jnp.float32(1.0 / (1.0 - dropout_rate))

        tile = out_ref[...].astype(jnp.float32)
        out_ref[...] = (tile * jnp.where(keep, scale, jnp.float32(0.0))
                        ).astype(out_ref.dtype)


def news_encoder_forward(title_text, title_mask, word_embedding, *,
                         dropout_rate=0.2, train=False, seed=0):
    """Pallas equivalent of `self.dropout(self.word_embedding(title_text))`.

    title_mask is accepted for API parity with NewsEncoder.forward; the base
    module's own layers (embedding + dropout) do not consume it.
    """
    del title_mask
    B, S = title_text.shape
    V, D = word_embedding.shape
    N = B * S

    # nn.Dropout(p=1.0) zeroes everything; guard the 1/(1-p) scale.
    if train and dropout_rate >= 1.0:
        return jnp.zeros((B, S, D), jnp.float32)

    # Tokens per grid step: multiple of 8 (sublane-dense output), capped at 64.
    TM = min(64, max(8, int(pl.next_power_of_2(N))))
    n_blocks = pl.cdiv(N, TM)
    N_pad = n_blocks * TM

    flat_ids = title_text.reshape(N).astype(jnp.int32)
    if N_pad != N:
        flat_ids = jnp.pad(flat_ids, (0, N_pad - N))
    seed_arr = jnp.array([seed], dtype=jnp.int32)

    kernel = functools.partial(
        _embed_dropout_kernel,
        tm=TM,
        dropout_rate=float(dropout_rate),
        apply_dropout=bool(train),
    )

    out_flat = pl.pallas_call(
        kernel,
        out_shape=jax.ShapeDtypeStruct((N_pad, D), jnp.float32),
        grid_spec=pltpu.PrefetchScalarGridSpec(
            num_scalar_prefetch=2,          # (flat_ids, seed) -> SMEM
            grid=(n_blocks,),               # TM tokens per grid step
            in_specs=[
                # Whole table resident in VMEM; constant block index so the
                # pipeline fetches it once and reuses it across grid steps.
                pl.BlockSpec((V, D), lambda i, ids, seed: (0, 0)),
            ],
            out_specs=pl.BlockSpec((TM, D), lambda i, ids, seed: (i, 0)),
        ),
        compiler_params=pltpu.CompilerParams(
            dimension_semantics=("parallel",),   # rows independent; v7x 2 TCs
        ),
        cost_estimate=pl.CostEstimate(
            flops=N_pad * D,
            transcendentals=0,
            bytes_accessed=V * D * 4 + N_pad * D * 4 + N_pad * 4,
        ),
    )(flat_ids, seed_arr, word_embedding)

    return out_flat[:N].reshape(B, S, D)


if __name__ == "__main__":
    key = jax.random.PRNGKey(0)
    k_emb, k_ids = jax.random.split(key)

    # Small, deterministic "config": vocab=64, word_embedding_dim=128,
    # batch=2, max_title_length=8.
    vocabulary_size = 64
    word_embedding_dim = 128
    batch = 2
    max_title_length = 8
    dropout_rate = 0.2

    # Deterministic synthetic embedding table (stands in for the pickle load).
    word_embedding = 0.1 * jax.random.normal(
        k_emb, (vocabulary_size, word_embedding_dim), dtype=jnp.float32)

    title_text = jax.random.randint(
        k_ids, (batch, max_title_length), 0, vocabulary_size, dtype=jnp.int32)
    title_mask = jnp.ones((batch, max_title_length), dtype=jnp.float32)

    ref = word_embedding[title_text]

    # Eval path (dropout is identity) — verify against pure-JAX embedding lookup.
    out_eval = news_encoder_forward(
        title_text, title_mask, word_embedding,
        dropout_rate=dropout_rate, train=False)
    jax.block_until_ready(out_eval)
    assert out_eval.shape == (batch, max_title_length, word_embedding_dim)
    assert jnp.allclose(out_eval, ref, atol=1e-6), \
        "mismatch vs reference embedding lookup"

    # Training path (deterministic in-kernel dropout given seed).
    out_train = news_encoder_forward(
        title_text, title_mask, word_embedding,
        dropout_rate=dropout_rate, train=True, seed=42)
    jax.block_until_ready(out_train)
    assert out_train.shape == (batch, max_title_length, word_embedding_dim)

    # Every element is either dropped (0) or scaled by 1/(1-p).
    scale = 1.0 / (1.0 - dropout_rate)
    is_zero = jnp.isclose(out_train, 0.0, atol=1e-7)
    is_scaled = jnp.isclose(out_train, ref * scale, atol=1e-5)
    assert bool(jnp.all(is_zero | is_scaled)), "dropout output not {0, x/(1-p)}"

    # Determinism: same seed -> same mask.
    out_train2 = news_encoder_forward(
        title_text, title_mask, word_embedding,
        dropout_rate=dropout_rate, train=True, seed=42)
    jax.block_until_ready(out_train2)
    assert jnp.array_equal(out_train, out_train2), "dropout not deterministic"

    print("KERNEL_OK")
</pallas_src>

<mosaic_0001>
module attributes {stable_mosaic.version = 11 : i64} {
  func.func @_embed_dropout_kernel(%arg0: i32, %arg1: memref<16xi32, #tpu.memory_space<smem>>, %arg2: memref<1xi32, #tpu.memory_space<smem>>, %arg3: memref<64x128xf32, #tpu.memory_space<vmem>>, %arg4: memref<16x128xf32, #tpu.memory_space<vmem>>) attributes {dimension_semantics = [#tpu.dimension_semantics<parallel>], iteration_bounds = array<i64: 1>, scalar_prefetch = 2 : i64, scratch_operands = 0 : i64, tpu.core_type = #tpu.core_type<tc>, window_params = [{pipeline_mode = #tpu.pipeline_mode<synchronous>, transform_indices = @transform_0, window_bounds = array<i64: 64, 128>}, {transform_indices = @transform_1, window_bounds = array<i64: 16, 128>}]} {
    %c16_i32 = arith.constant 16 : i32
    %0 = arith.muli %arg0, %c16_i32 : i32
    %c0_i32 = arith.constant 0 : i32
    %1 = arith.addi %0, %c0_i32 : i32
    %2 = arith.index_cast %1 : i32 to index
    %3 = memref.load %arg1[%2] : memref<16xi32, #tpu.memory_space<smem>>
    %4 = arith.index_cast %3 : i32 to index
    %c0 = arith.constant 0 : index
    %5 = vector.load %arg3[%4, %c0] : memref<64x128xf32, #tpu.memory_space<vmem>>, vector<1x128xf32>
    %6 = vector.shape_cast %5 : vector<1x128xf32> to vector<128xf32>
    %c0_0 = arith.constant 0 : index
    %c0_1 = arith.constant 0 : index
    %7 = vector.load %arg4[%c0_0, %c0_1] : memref<16x128xf32, #tpu.memory_space<vmem>>, vector<1x128xf32>
    %8 = vector.shape_cast %7 : vector<1x128xf32> to vector<128xf32>
    %9 = vector.shape_cast %6 : vector<128xf32> to vector<1x128xf32>
    tpu.vector_store %arg4[%c0_0, %c0_1], %9 {strides = array<i32>} : memref<16x128xf32, #tpu.memory_space<vmem>>, vector<1x128xf32>,
    %c1_i32 = arith.constant 1 : i32
    %10 = arith.addi %0, %c1_i32 : i32
    %11 = arith.index_cast %10 : i32 to index
    %12 = memref.load %arg1[%11] : memref<16xi32, #tpu.memory_space<smem>>
    %13 = arith.index_cast %12 : i32 to index
    %c0_2 = arith.constant 0 : index
    %14 = vector.load %arg3[%13, %c0_2] : memref<64x128xf32, #tpu.memory_space<vmem>>, vector<1x128xf32>
    %15 = vector.shape_cast %14 : vector<1x128xf32> to vector<128xf32>
    %c1 = arith.constant 1 : index
    %c0_3 = arith.constant 0 : index
    %16 = vector.load %arg4[%c1, %c0_3] : memref<16x128xf32, #tpu.memory_space<vmem>>, vector<1x128xf32>
    %17 = vector.shape_cast %16 : vector<1x128xf32> to vector<128xf32>
    %18 = vector.shape_cast %15 : vector<128xf32> to vector<1x128xf32>
    tpu.vector_store %arg4[%c1, %c0_3], %18 {strides = array<i32>} : memref<16x128xf32, #tpu.memory_space<vmem>>, vector<1x128xf32>,
    %c2_i32 = arith.constant 2 : i32
    %19 = arith.addi %0, %c2_i32 : i32
    %20 = arith.index_cast %19 : i32 to index
    %21 = memref.load %arg1[%20] : memref<16xi32, #tpu.memory_space<smem>>
    %22 = arith.index_cast %21 : i32 to index
    %c0_4 = arith.constant 0 : index
    %23 = vector.load %arg3[%22, %c0_4] : memref<64x128xf32, #tpu.memory_space<vmem>>, vector<1x128xf32>
    %24 = vector.shape_cast %23 : vector<1x128xf32> to vector<128xf32>
    %c2 = arith.constant 2 : index
    %c0_5 = arith.constant 0 : index
    %25 = vector.load %arg4[%c2, %c0_5] : memref<16x128xf32, #tpu.memory_space<vmem>>, vector<1x128xf32>
    %26 = vector.shape_cast %25 : vector<1x128xf32> to vector<128xf32>
    %27 = vector.shape_cast %24 : vector<128xf32> to vector<1x128xf32>
    tpu.vector_store %arg4[%c2, %c0_5], %27 {strides = array<i32>} : memref<16x128xf32, #tpu.memory_space<vmem>>, vector<1x128xf32>,
    %c3_i32 = arith.constant 3 : i32
    %28 = arith.addi %0, %c3_i32 : i32
    %29 = arith.index_cast %28 : i32 to index
    %30 = memref.load %arg1[%29] : memref<16xi32, #tpu.memory_space<smem>>
    %31 = arith.index_cast %30 : i32 to index
    %c0_6 = arith.constant 0 : index
    %32 = vector.load %arg3[%31, %c0_6] : memref<64x128xf32, #tpu.memory_space<vmem>>, vector<1x128xf32>
    %33 = vector.shape_cast %32 : vector<1x128xf32> to vector<128xf32>
    %c3 = arith.constant 3 : index
    %c0_7 = arith.constant 0 : index
    %34 = vector.load %arg4[%c3, %c0_7] : memref<16x128xf32, #tpu.memory_space<vmem>>, vector<1x128xf32>
    %35 = vector.shape_cast %34 : vector<1x128xf32> to vector<128xf32>
    %36 = vector.shape_cast %33 : vector<128xf32> to vector<1x128xf32>
    tpu.vector_store %arg4[%c3, %c0_7], %36 {strides = array<i32>} : memref<16x128xf32, #tpu.memory_space<vmem>>, vector<1x128xf32>,
    %c4_i32 = arith.constant 4 : i32
    %37 = arith.addi %0, %c4_i32 : i32
    %38 = arith.index_cast %37 : i32 to index
    %39 = memref.load %arg1[%38] : memref<16xi32, #tpu.memory_space<smem>>
    %40 = arith.index_cast %39 : i32 to index
    %c0_8 = arith.constant 0 : index
    %41 = vector.load %arg3[%40, %c0_8] : memref<64x128xf32, #tpu.memory_space<vmem>>, vector<1x128xf32>
    %42 = vector.shape_cast %41 : vector<1x128xf32> to vector<128xf32>
    %c4 = arith.constant 4 : index
    %c0_9 = arith.constant 0 : index
    %43 = vector.load %arg4[%c4, %c0_9] : memref<16x128xf32, #tpu.memory_space<vmem>>, vector<1x128xf32>
    %44 = vector.shape_cast %43 : vector<1x128xf32> to vector<128xf32>
    %45 = vector.shape_cast %42 : vector<128xf32> to vector<1x128xf32>
    tpu.vector_store %arg4[%c4, %c0_9], %45 {strides = array<i32>} : memref<16x128xf32, #tpu.memory_space<vmem>>, vector<1x128xf32>,
    %c5_i32 = arith.constant 5 : i32
    %46 = arith.addi %0, %c5_i32 : i32
    %47 = arith.index_cast %46 : i32 to index
    %48 = memref.load %arg1[%47] : memref<16xi32, #tpu.memory_space<smem>>
    %49 = arith.index_cast %48 : i32 to index
    %c0_10 = arith.constant 0 : index
    %50 = vector.load %arg3[%49, %c0_10] : memref<64x128xf32, #tpu.memory_space<vmem>>, vector<1x128xf32>
    %51 = vector.shape_cast %50 : vector<1x128xf32> to vector<128xf32>
    %c5 = arith.constant 5 : index
    %c0_11 = arith.constant 0 : index
    %52 = vector.load %arg4[%c5, %c0_11] : memref<16x128xf32, #tpu.memory_space<vmem>>, vector<1x128xf32>
    %53 = vector.shape_cast %52 : vector<1x128xf32> to vector<128xf32>
    %54 = vector.shape_cast %51 : vector<128xf32> to vector<1x128xf32>
    tpu.vector_store %arg4[%c5, %c0_11], %54 {strides = array<i32>} : memref<16x128xf32, #tpu.memory_space<vmem>>, vector<1x128xf32>,
    %c6_i32 = arith.constant 6 : i32
    %55 = arith.addi %0, %c6_i32 : i32
    %56 = arith.index_cast %55 : i32 to index
    %57 = memref.load %arg1[%56] : memref<16xi32, #tpu.memory_space<smem>>
    %58 = arith.index_cast %57 : i32 to index
    %c0_12 = arith.constant 0 : index
    %59 = vector.load %arg3[%58, %c0_12] : memref<64x128xf32, #tpu.memory_space<vmem>>, vector<1x128xf32>
    %60 = vector.shape_cast %59 : vector<1x128xf32> to vector<128xf32>
    %c6 = arith.constant 6 : index
    %c0_13 = arith.constant 0 : index
    %61 = vector.load %arg4[%c6, %c0_13] : memref<16x128xf32, #tpu.memory_space<vmem>>, vector<1x128xf32>
    %62 = vector.shape_cast %61 : vector<1x128xf32> to vector<128xf32>
    %63 = vector.shape_cast %60 : vector<128xf32> to vector<1x128xf32>
    tpu.vector_store %arg4[%c6, %c0_13], %63 {strides = array<i32>} : memref<16x128xf32, #tpu.memory_space<vmem>>, vector<1x128xf32>,
    %c7_i32 = arith.constant 7 : i32
    %64 = arith.addi %0, %c7_i32 : i32
    %65 = arith.index_cast %64 : i32 to index
    %66 = memref.load %arg1[%65] : memref<16xi32, #tpu.memory_space<smem>>
    %67 = arith.index_cast %66 : i32 to index
    %c0_14 = arith.constant 0 : index
    %68 = vector.load %arg3[%67, %c0_14] : memref<64x128xf32, #tpu.memory_space<vmem>>, vector<1x128xf32>
    %69 = vector.shape_cast %68 : vector<1x128xf32> to vector<128xf32>
    %c7 = arith.constant 7 : index
    %c0_15 = arith.constant 0 : index
    %70 = vector.load %arg4[%c7, %c0_15] : memref<16x128xf32, #tpu.memory_space<vmem>>, vector<1x128xf32>
    %71 = vector.shape_cast %70 : vector<1x128xf32> to vector<128xf32>
    %72 = vector.shape_cast %69 : vector<128xf32> to vector<1x128xf32>
    tpu.vector_store %arg4[%c7, %c0_15], %72 {strides = array<i32>} : memref<16x128xf32, #tpu.memory_space<vmem>>, vector<1x128xf32>,
    %c8_i32 = arith.constant 8 : i32
    %73 = arith.addi %0, %c8_i32 : i32
    %74 = arith.index_cast %73 : i32 to index
    %75 = memref.load %arg1[%74] : memref<16xi32, #tpu.memory_space<smem>>
    %76 = arith.index_cast %75 : i32 to index
    %c0_16 = arith.constant 0 : index
    %77 = vector.load %arg3[%76, %c0_16] : memref<64x128xf32, #tpu.memory_space<vmem>>, vector<1x128xf32>
    %78 = vector.shape_cast %77 : vector<1x128xf32> to vector<128xf32>
    %c8 = arith.constant 8 : index
    %c0_17 = arith.constant 0 : index
    %79 = vector.load %arg4[%c8, %c0_17] : memref<16x128xf32, #tpu.memory_space<vmem>>, vector<1x128xf32>
    %80 = vector.shape_cast %79 : vector<1x128xf32> to vector<128xf32>
    %81 = vector.shape_cast %78 : vector<128xf32> to vector<1x128xf32>
    tpu.vector_store %arg4[%c8, %c0_17], %81 {strides = array<i32>} : memref<16x128xf32, #tpu.memory_space<vmem>>, vector<1x128xf32>,
    %c9_i32 = arith.constant 9 : i32
    %82 = arith.addi %0, %c9_i32 : i32
    %83 = arith.index_cast %82 : i32 to index
    %84 = memref.load %arg1[%83] : memref<16xi32, #tpu.memory_space<smem>>
    %85 = arith.index_cast %84 : i32 to index
    %c0_18 = arith.constant 0 : index
    %86 = vector.load %arg3[%85, %c0_18] : memref<64x128xf32, #tpu.memory_space<vmem>>, vector<1x128xf32>
    %87 = vector.shape_cast %86 : vector<1x128xf32> to vector<128xf32>
    %c9 = arith.constant 9 : index
    %c0_19 = arith.constant 0 : index
    %88 = vector.load %arg4[%c9, %c0_19] : memref<16x128xf32, #tpu.memory_space<vmem>>, vector<1x128xf32>
    %89 = vector.shape_cast %88 : vector<1x128xf32> to vector<128xf32>
    %90 = vector.shape_cast %87 : vector<128xf32> to vector<1x128xf32>
    tpu.vector_store %arg4[%c9, %c0_19], %90 {strides = array<i32>} : memref<16x128xf32, #tpu.memory_space<vmem>>, vector<1x128xf32>,
    %c10_i32 = arith.constant 10 : i32
    %91 = arith.addi %0, %c10_i32 : i32
    %92 = arith.index_cast %91 : i32 to index
    %93 = memref.load %arg1[%92] : memref<16xi32, #tpu.memory_space<smem>>
    %94 = arith.index_cast %93 : i32 to index
    %c0_20 = arith.constant 0 : index
    %95 = vector.load %arg3[%94, %c0_20] : memref<64x128xf32, #tpu.memory_space<vmem>>, vector<1x128xf32>
    %96 = vector.shape_cast %95 : vector<1x128xf32> to vector<128xf32>
    %c10 = arith.constant 10 : index
    %c0_21 = arith.constant 0 : index
    %97 = vector.load %arg4[%c10, %c0_21] : memref<16x128xf32, #tpu.memory_space<vmem>>, vector<1x128xf32>
    %98 = vector.shape_cast %97 : vector<1x128xf32> to vector<128xf32>
    %99 = vector.shape_cast %96 : vector<128xf32> to vector<1x128xf32>
    tpu.vector_store %arg4[%c10, %c0_21], %99 {strides = array<i32>} : memref<16x128xf32, #tpu.memory_space<vmem>>, vector<1x128xf32>,
    %c11_i32 = arith.constant 11 : i32
    %100 = arith.addi %0, %c11_i32 : i32
    %101 = arith.index_cast %100 : i32 to index
    %102 = memref.load %arg1[%101] : memref<16xi32, #tpu.memory_space<smem>>
    %103 = arith.index_cast %102 : i32 to index
    %c0_22 = arith.constant 0 : index
    %104 = vector.load %arg3[%103, %c0_22] : memref<64x128xf32, #tpu.memory_space<vmem>>, vector<1x128xf32>
    %105 = vector.shape_cast %104 : vector<1x128xf32> to vector<128xf32>
    %c11 = arith.constant 11 : index
    %c0_23 = arith.constant 0 : index
    %106 = vector.load %arg4[%c11, %c0_23] : memref<16x128xf32, #tpu.memory_space<vmem>>, vector<1x128xf32>
    %107 = vector.shape_cast %106 : vector<1x128xf32> to vector<128xf32>
    %108 = vector.shape_cast %105 : vector<128xf32> to vector<1x128xf32>
    tpu.vector_store %arg4[%c11, %c0_23], %108 {strides = array<i32>} : memref<16x128xf32, #tpu.memory_space<vmem>>, vector<1x128xf32>,
    %c12_i32 = arith.constant 12 : i32
    %109 = arith.addi %0, %c12_i32 : i32
    %110 = arith.index_cast %109 : i32 to index
    %111 = memref.load %arg1[%110] : memref<16xi32, #tpu.memory_space<smem>>
    %112 = arith.index_cast %111 : i32 to index
    %c0_24 = arith.constant 0 : index
    %113 = vector.load %arg3[%112, %c0_24] : memref<64x128xf32, #tpu.memory_space<vmem>>, vector<1x128xf32>
    %114 = vector.shape_cast %113 : vector<1x128xf32> to vector<128xf32>
    %c12 = arith.constant 12 : index
    %c0_25 = arith.constant 0 : index
    %115 = vector.load %arg4[%c12, %c0_25] : memref<16x128xf32, #tpu.memory_space<vmem>>, vector<1x128xf32>
    %116 = vector.shape_cast %115 : vector<1x128xf32> to vector<128xf32>
    %117 = vector.shape_cast %114 : vector<128xf32> to vector<1x128xf32>
    tpu.vector_store %arg4[%c12, %c0_25], %117 {strides = array<i32>} : memref<16x128xf32, #tpu.memory_space<vmem>>, vector<1x128xf32>,
    %c13_i32 = arith.constant 13 : i32
    %118 = arith.addi %0, %c13_i32 : i32
    %119 = arith.index_cast %118 : i32 to index
    %120 = memref.load %arg1[%119] : memref<16xi32, #tpu.memory_space<smem>>
    %121 = arith.index_cast %120 : i32 to index
    %c0_26 = arith.constant 0 : index
    %122 = vector.load %arg3[%121, %c0_26] : memref<64x128xf32, #tpu.memory_space<vmem>>, vector<1x128xf32>
    %123 = vector.shape_cast %122 : vector<1x128xf32> to vector<128xf32>
    %c13 = arith.constant 13 : index
    %c0_27 = arith.constant 0 : index
    %124 = vector.load %arg4[%c13, %c0_27] : memref<16x128xf32, #tpu.memory_space<vmem>>, vector<1x128xf32>
    %125 = vector.shape_cast %124 : vector<1x128xf32> to vector<128xf32>
    %126 = vector.shape_cast %123 : vector<128xf32> to vector<1x128xf32>
    tpu.vector_store %arg4[%c13, %c0_27], %126 {strides = array<i32>} : memref<16x128xf32, #tpu.memory_space<vmem>>, vector<1x128xf32>,
    %c14_i32 = arith.constant 14 : i32
    %127 = arith.addi %0, %c14_i32 : i32
    %128 = arith.index_cast %127 : i32 to index
    %129 = memref.load %arg1[%128] : memref<16xi32, #tpu.memory_space<smem>>
    %130 = arith.index_cast %129 : i32 to index
    %c0_28 = arith.constant 0 : index
    %131 = vector.load %arg3[%130, %c0_28] : memref<64x128xf32, #tpu.memory_space<vmem>>, vector<1x128xf32>
    %132 = vector.shape_cast %131 : vector<1x128xf32> to vector<128xf32>
    %c14 = arith.constant 14 : index
    %c0_29 = arith.constant 0 : index
    %133 = vector.load %arg4[%c14, %c0_29] : memref<16x128xf32, #tpu.memory_space<vmem>>, vector<1x128xf32>
    %134 = vector.shape_cast %133 : vector<1x128xf32> to vector<128xf32>
    %135 = vector.shape_cast %132 : vector<128xf32> to vector<1x128xf32>
    tpu.vector_store %arg4[%c14, %c0_29], %135 {strides = array<i32>} : memref<16x128xf32, #tpu.memory_space<vmem>>, vector<1x128xf32>,
    %c15_i32 = arith.constant 15 : i32
    %136 = arith.addi %0, %c15_i32 : i32
    %137 = arith.index_cast %136 : i32 to index
    %138 = memref.load %arg1[%137] : memref<16xi32, #tpu.memory_space<smem>>
    %139 = arith.index_cast %138 : i32 to index
    %c0_30 = arith.constant 0 : index
    %140 = vector.load %arg3[%139, %c0_30] : memref<64x128xf32, #tpu.memory_space<vmem>>, vector<1x128xf32>
    %141 = vector.shape_cast %140 : vector<1x128xf32> to vector<128xf32>
    %c15 = arith.constant 15 : index
    %c0_31 = arith.constant 0 : index
    %142 = vector.load %arg4[%c15, %c0_31] : memref<16x128xf32, #tpu.memory_space<vmem>>, vector<1x128xf32>
    %143 = vector.shape_cast %142 : vector<1x128xf32> to vector<128xf32>
    %144 = vector.shape_cast %141 : vector<128xf32> to vector<1x128xf32>
    tpu.vector_store %arg4[%c15, %c0_31], %144 {strides = array<i32>} : memref<16x128xf32, #tpu.memory_space<vmem>>, vector<1x128xf32>,
    return
  }
  func.func @transform_0(%arg0: i32, %arg1: memref<16xi32, #tpu.memory_space<smem>>, %arg2: memref<1xi32, #tpu.memory_space<smem>>) -> (i32, i32) {
    %c0_i32 = arith.constant 0 : i32
    %c0_i32_0 = arith.constant 0 : i32
    %c0_i32_1 = arith.constant 0 : i32
    return %c0_i32, %c0_i32_0 : i32, i32
  }
  func.func @transform_1(%arg0: i32, %arg1: memref<16xi32, #tpu.memory_space<smem>>, %arg2: memref<1xi32, #tpu.memory_space<smem>>) -> (i32, i32) {
    %c0_i32 = arith.constant 0 : i32
    %c0_i32_0 = arith.constant 0 : i32
    return %arg0, %c0_i32 : i32, i32
  }
}

</mosaic_0001>

<llo_original>
// kernel: tpu_custom_call.1
$region0: #{tpu_custom_call.1}
  #allocation0 [shape = 'u32[]', space=smem, size = 0x4, offset = 0x4, fixed_abs, tag = 'smem constant byte address 0x4 - core index']
  #allocation1 [shape = 'u32[144,128]{1,0:T(1,128)}', space=vmem, size = 0x12000, scoped, tag = 'internal scratch']
  #allocation2 [shape = 's32[1]{0}', space=sflag, size = 0x4, scoped, tag = 'scoped memory for tpu_custom_call.1']
  #allocation3 [shape = 'u8[512]{0}', space=smem, size = 0x200, scoped, tag = 'prefetched SMEM operand 0']
  #allocation4 [shape = 's32[1]{0:T(128)S(6)}', space=smem, size = 0x200, scoped, tag = 'prefetched SMEM operand 1']
  %s0 = inlined_call_operand.vmem [shape: s32[16], index: 0, kind: input, shape index: {}]
  %s1 = inlined_call_operand.<no memory space> [shape: s32[1], index: 1, kind: input, shape index: {}]
  %s2 = inlined_call_operand.hbm [shape: f32[64,128], index: 2, kind: input, shape index: {}]
  %s3 = inlined_call_operand.hbm [shape: f32[16,128], index: 3, kind: output, shape index: {}]
  %s4 = sld [smem:[#allocation0]]
  $region18: #{tpu_custom_call.1} parent=0
    _
  %s6 = ssub.s32 1, %s4
  %s7 = scalar_select 0, %s6, %s4
  %s8 = sshll.u32 %s0, 4
  %s9 = int_to_ptr.vmem [resolvable:$true] %s8
  %11 = dma.vmem_to_smem %s9, 16, [#allocation3], [#allocation2]
  %12 = sst [smem:[#allocation4]] %s1
  %13 = dma.done [#allocation2], 16
  %14 = sfence
  $region1: #{tpu_custom_call.1} parent=0
    #allocation5 [shape = 'u8[32768]{0}', space=vmem, size = 0x8000, scoped, tag = 'input window, operand 2, single buffered']
    #allocation6 [shape = 's32[1]{0}', space=sflag, size = 0x4, scoped, tag = 'scoped memory for tpu_custom_call.1']
    #allocation7 [shape = 's32[1]{0}', space=sflag, size = 0x4, scoped, tag = 'scoped memory for tpu_custom_call.1']
    #allocation8 [shape = 'u8[8192]{0}', space=vmem, size = 0x2000, scoped, tag = 'output window, operand 0, single buffered']
    %15 = vsyncpa [#allocation6], 0
    %16 = vsyncpa [#allocation7], 0
    // Predicated region
    $region2: #{tpu_custom_call.1} parent=1 // pred_check
      _
    $region3: #{tpu_custom_call.1} parent=1 // pred_check_branch
      %18 = sbr.rel (0) target = $region5
    $region4: #{tpu_custom_call.1} parent=1 // pred_region
      %s20 = ssub.s32 1024, 1024
      %21 = vsyncadd [#allocation6], %s20
      %s22 = sshll.u32 [#allocation5], 4
      %s23 = int_to_ptr.vmem [resolvable:$true] %s22
      %28 = dma.hbm_to_vmem [thread:$0]  %s2, 1024, %s23, [#allocation6], 128, 128, 8
    $region5: #{tpu_custom_call.1} parent=1 // pred_fallthru
      _
    // Predicated region
    $region6: #{tpu_custom_call.1} parent=1 // pred_check
      _
    $region7: #{tpu_custom_call.1} parent=1 // pred_check_branch
      %30 = sbr.rel (0) target = $region9
    $region8: #{tpu_custom_call.1} parent=1 // pred_region
      %31 = dma.done [#allocation6], 1024
    $region9: #{tpu_custom_call.1} parent=1 // pred_fallthru
      _
    %s32 = smul.u32 0, 16
    %s33 = sld [smem:[#allocation3 + %s32]]
    %s34 = scalar_lea.vmem [#allocation5], %s33
    %v35 = vld [vmem:[%s34] sm:$0x1]
    %36 = vst [vmem:[#allocation8] sm:$0x1] %v35
    %s37 = sadd.s32 %s32, 1
    %s38 = sld [smem:[#allocation3 + %s37]]
    %s39 = scalar_lea.vmem [#allocation5], %s38
    %v40 = vld [vmem:[%s39] sm:$0x1]
    %41 = vst [vmem:[#allocation8 + $0x1] sm:$0x1] %v40
    %s42 = sadd.s32 %s32, 2
    %s43 = sld [smem:[#allocation3 + %s42]]
    %s44 = scalar_lea.vmem [#allocation5], %s43
    %v45 = vld [vmem:[%s44] sm:$0x1]
    %46 = vst [vmem:[#allocation8 + $0x2] sm:$0x1] %v45
    %s47 = sadd.s32 %s32, 3
    %s48 = sld [smem:[#allocation3 + %s47]]
    %s49 = scalar_lea.vmem [#allocation5], %s48
    %v50 = vld [vmem:[%s49] sm:$0x1]
    %51 = vst [vmem:[#allocation8 + $0x3] sm:$0x1] %v50
    %s52 = sadd.s32 %s32, 4
    %s53 = sld [smem:[#allocation3 + %s52]]
    %s54 = scalar_lea.vmem [#allocation5], %s53
    %v55 = vld [vmem:[%s54] sm:$0x1]
    %56 = vst [vmem:[#allocation8 + $0x4] sm:$0x1] %v55
    %s57 = sadd.s32 %s32, 5
    %s58 = sld [smem:[#allocation3 + %s57]]
    %s59 = scalar_lea.vmem [#allocation5], %s58
    %v60 = vld [vmem:[%s59] sm:$0x1]
    %61 = vst [vmem:[#allocation8 + $0x5] sm:$0x1] %v60
    %s62 = sadd.s32 %s32, 6
    %s63 = sld [smem:[#allocation3 + %s62]]
    %s64 = scalar_lea.vmem [#allocation5], %s63
    %v65 = vld [vmem:[%s64] sm:$0x1]
    %66 = vst [vmem:[#allocation8 + $0x6] sm:$0x1] %v65
    %s67 = sadd.s32 %s32, 7
    %s68 = sld [smem:[#allocation3 + %s67]]
    %s69 = scalar_lea.vmem [#allocation5], %s68
    %v70 = vld [vmem:[%s69] sm:$0x1]
    %71 = vst [vmem:[#allocation8 + $0x7] sm:$0x1] %v70
    %s72 = sadd.s32 %s32, 8
    %s73 = sld [smem:[#allocation3 + %s72]]
    %s74 = scalar_lea.vmem [#allocation5], %s73
    %v75 = vld [vmem:[%s74] sm:$0x1]
    %76 = vst [vmem:[#allocation8 + $0x8] sm:$0x1] %v75
    %s77 = sadd.s32 %s32, 9
    %s78 = sld [smem:[#allocation3 + %s77]]
    %s79 = scalar_lea.vmem [#allocation5], %s78
    %v80 = vld [vmem:[%s79] sm:$0x1]
    %81 = vst [vmem:[#allocation8 + $0x9] sm:$0x1] %v80
    %s82 = sadd.s32 %s32, 10
    %s83 = sld [smem:[#allocation3 + %s82]]
    %s84 = scalar_lea.vmem [#allocation5], %s83
    %v85 = vld [vmem:[%s84] sm:$0x1]
    %86 = vst [vmem:[#allocation8 + $0xa] sm:$0x1] %v85
    %s87 = sadd.s32 %s32, 11
    %s88 = sld [smem:[#allocation3 + %s87]]
    %s89 = scalar_lea.vmem [#allocation5], %s88
    %v90 = vld [vmem:[%s89] sm:$0x1]
    %91 = vst [vmem:[#allocation8 + $0xb] sm:$0x1] %v90
    %s92 = sadd.s32 %s32, 12
    %s93 = sld [smem:[#allocation3 + %s92]]
    %s94 = scalar_lea.vmem [#allocation5], %s93
    %v95 = vld [vmem:[%s94] sm:$0x1]
    %96 = vst [vmem:[#allocation8 + $0xc] sm:$0x1] %v95
    %s97 = sadd.s32 %s32, 13
    %s98 = sld [smem:[#allocation3 + %s97]]
    %s99 = scalar_lea.vmem [#allocation5], %s98
    %v100 = vld [vmem:[%s99] sm:$0x1]
    %101 = vst [vmem:[#allocation8 + $0xd] sm:$0x1] %v100
    %s102 = sadd.s32 %s32, 14
    %s103 = sld [smem:[#allocation3 + %s102]]
    %s104 = scalar_lea.vmem [#allocation5], %s103
    %v105 = vld [vmem:[%s104] sm:$0x1]
    %106 = vst [vmem:[#allocation8 + $0xe] sm:$0x1] %v105
    %s107 = sadd.s32 %s32, 15
    %s108 = sld [smem:[#allocation3 + %s107]]
    %s109 = scalar_lea.vmem [#allocation5], %s108
    %v110 = vld [vmem:[%s109] sm:$0x1]
    %111 = vst [vmem:[#allocation8 + $0xf] sm:$0x1] %v110
    // Predicated region
    $region10: #{tpu_custom_call.1} parent=1 // pred_check
      _
    $region11: #{tpu_custom_call.1} parent=1 // pred_check_branch
      %113 = sbr.rel (0) target = $region13
    $region12: #{tpu_custom_call.1} parent=1 // pred_region
      %s115 = ssub.s32 256, 256
      %116 = vsyncadd [#allocation7], %s115
      %s117 = sshll.u32 [#allocation8], 4
      %s118 = int_to_ptr.vmem [resolvable:$true] %s117
      %123 = dma.vmem_to_hbm [thread:$0]  %s118, 256, %s3, [#allocation7], 128, 128, 8
    $region13: #{tpu_custom_call.1} parent=1 // pred_fallthru
      _
    // Predicated region
    $region14: #{tpu_custom_call.1} parent=1 // pred_check
      _
    $region15: #{tpu_custom_call.1} parent=1 // pred_check_branch
      %125 = sbr.rel (0) target = $region17
    $region16: #{tpu_custom_call.1} parent=1 // pred_region
      %126 = dma.done [#allocation7], 256
    $region17: #{tpu_custom_call.1} parent=1 // pred_fallthru
      _
    %127 = vsyncpa [#allocation6], 1
    %128 = vsyncpa [#allocation7], 1

</llo_original>
